<compile_context>
chip_gen: v6e
topology: v6e:2x2x1
jax: 0.10.0
libtpu: 0.0.40
codegen_flags: <defaults>
</compile_context>

<pallas_src>
import functools
import math

import jax
import jax.numpy as jnp
from jax.experimental import pallas as pl
from jax.experimental.pallas import tpu as pltpu


def _xlogx(x):
    return x * math.log(x) if x > 0.0 else 0.0


def _vmem_capacity_bytes():
    try:
        return int(pltpu.get_tpu_info().vmem_capacity_bytes)
    except Exception:
        return 64 << 20  # conservative default (v7x per-TC VMEM)


def _loss_ls_kernel(pred_ref, aux_ref, out_ref, *,
                    confidence, off_value, const_term):
    pred = pred_ref[...]                                  # (TM, V) native dtype
    aux = aux_ref[...]                                    # (TM, 2) f32
    tgt = aux[:, 0:1].astype(jnp.int32)                   # (TM, 1)
    mask = aux[:, 1:2]                                    # (TM, 1) f32

    V = pred.shape[-1]
    lane = jax.lax.broadcasted_iota(jnp.int32, (1, V), 1)  # vocab index (1, V)
    labels = jnp.where(lane == tgt,
                       jnp.float32(confidence),
                       jnp.float32(off_value))             # (TM, V) f32

    # KL row sum = const_term - sum_v(labels * pred); multiply promotes bf16.
    dot = jnp.sum(labels * pred, axis=-1, keepdims=True)   # (TM, 1) f32
    row_loss = jnp.float32(const_term) - dot               # (TM, 1)

    out_ref[...] = (row_loss * mask).astype(jnp.float32)   # per-row masked loss


def _pick_block_rows(n_rows, vocab, itemsize, vmem_cap):
    # Sublane packing multiple for the prediction dtype.
    sub = 8 * max(1, 4 // max(1, itemsize))         # 8 f32, 16 bf16, 32 int8
    lane = 128
    padded_v = -(-vocab // lane) * lane
    # VMEM bytes one grid step needs per row (pred + lane-padded aux + out).
    per_row = padded_v * itemsize + 2 * lane * 4
    # ~1/8 of VMEM for the live working set (double-buffering ~doubles it):
    # v7x (64 MiB) -> 8 MiB, v5e/v6e (128 MiB) -> 16 MiB target per step.
    target_bytes = max(1 << 20, min(16 << 20, vmem_cap // 8))
    tm = max(sub, target_bytes // per_row)
    # Keep >= 2 blocks (when there are enough rows) so the "parallel" grid
    # axis can be sharded across both v7x TensorCores.
    half_rows = (n_rows + 1) // 2
    half = max(sub, ((half_rows + sub - 1) // sub) * sub)
    tm = min(tm, half)
    return max(sub, (tm // sub) * sub)


def loss_with_ls(prediction, target, mask, *, size, smooth, block_rows=None):
    """prediction: (B, T, V) log-probs; target, mask: (B, T)."""
    B, T, V = prediction.shape
    N = B * T

    # Prediction stays untouched in HBM (no pad, no cast); cast is in-kernel
    # via the multiply promotion.  target+mask fused into one tiny side input.
    pred2d = prediction.reshape(N, V)
    aux = jnp.stack(
        [target.reshape(N).astype(jnp.float32),   # exact for vocab < 2^24
         mask.reshape(N).astype(jnp.float32)],
        axis=-1)                                   # (N, 2) f32

    itemsize = jnp.dtype(prediction.dtype).itemsize
    vmem_cap = _vmem_capacity_bytes()
    sub = 8 * max(1, 4 // max(1, itemsize))
    if block_rows is None:
        block_rows = _pick_block_rows(N, V, itemsize, vmem_cap)
    block_rows = max(sub, (block_rows // sub) * sub)

    num_blocks = pl.cdiv(N, block_rows)

    confidence = 1.0 - smooth
    off_value = smooth / (size - 1)
    # Per-row sum of labels*log(labels): one confidence lane + (V-1) off lanes.
    const_term = _xlogx(confidence) + (V - 1) * _xlogx(off_value)

    kernel = functools.partial(
        _loss_ls_kernel,
        confidence=confidence, off_value=off_value, const_term=const_term)

    # Explicit VMEM budget from the (lane-padded) tile sizes, double-buffered,
    # clipped generation-aware.
    lane = 128
    padded_v = -(-V // lane) * lane
    pred_tile = block_rows * padded_v * itemsize
    aux_tile = block_rows * lane * 4
    out_tile = block_rows * lane * 4
    vmem_limit = 2 * (pred_tile + aux_tile + out_tile) + (4 << 20)
    vmem_limit = max(vmem_limit, 16 << 20)
    vmem_limit = min(vmem_limit, int(0.75 * vmem_cap))

    row_losses = pl.pallas_call(
        kernel,
        out_shape=jax.ShapeDtypeStruct((N, 1), jnp.float32),
        grid_spec=pltpu.PrefetchScalarGridSpec(
            num_scalar_prefetch=0,
            grid=(num_blocks,),
            in_specs=[
                pl.BlockSpec((block_rows, V), lambda i: (i, 0)),
                pl.BlockSpec((block_rows, 2), lambda i: (i, 0)),
            ],
            out_specs=pl.BlockSpec((block_rows, 1), lambda i: (i, 0)),
        ),
        compiler_params=pltpu.CompilerParams(
            dimension_semantics=("parallel",),
            vmem_limit_bytes=vmem_limit),
    )(pred2d, aux)

    num = jnp.sum(row_losses)
    den = jnp.sum(mask.astype(jnp.float32))
    return num / den


def _reference(prediction, target, mask, *, size, smooth):
    """Pure-JAX mirror of the PyTorch forward for verification."""
    B, T, V = prediction.shape
    pred = prediction.reshape(-1, V).astype(jnp.float32)
    tgt = target.reshape(-1)
    msk = mask.reshape(-1).astype(jnp.float32)
    confidence = 1.0 - smooth
    off_value = smooth / (size - 1)
    labels = jnp.full_like(pred, off_value)
    labels = labels.at[jnp.arange(pred.shape[0]), tgt].set(confidence)
    kl = labels * (jnp.log(labels) - pred)
    return jnp.sum(jnp.sum(kl, axis=1) * msk) / jnp.sum(msk)


def _make_inputs(key, B, T, V, dtype=jnp.float32):
    k1, k2, k3 = jax.random.split(key, 3)
    logits = jax.random.normal(k1, (B, T, V), dtype=jnp.float32)
    prediction = jax.nn.log_softmax(logits, axis=-1).astype(dtype)
    target = jax.random.randint(k2, (B, T), 0, V, dtype=jnp.int32)
    mask = (jax.random.uniform(k3, (B, T)) > 0.3).astype(jnp.float32)
    return prediction, target, mask


if __name__ == "__main__":
    smooth = 0.1
    key = jax.random.PRNGKey(0)
    k_a, k_b, k_c = jax.random.split(key, 3)

    # 1) f32, N divisible by the chosen tile (auto picks 2 blocks for 2 TCs).
    B, T, V = 2, 8, 32
    pred, tgt, msk = _make_inputs(k_a, B, T, V, jnp.float32)
    ref = _reference(pred, tgt, msk, size=V, smooth=smooth)
    out = jax.block_until_ready(loss_with_ls(pred, tgt, msk, size=V, smooth=smooth))
    assert jnp.allclose(out, ref, rtol=1e-5, atol=1e-5), (out, ref)

    # 2) f32, ragged tail (N = 15 not divisible by block_rows=8): exercises the
    #    no-pad path where the last block reads/writes a partial tile.
    B, T, V = 3, 5, 32
    pred, tgt, msk = _make_inputs(k_b, B, T, V, jnp.float32)
    ref = _reference(pred, tgt, msk, size=V, smooth=smooth)
    out = jax.block_until_ready(
        loss_with_ls(pred, tgt, msk, size=V, smooth=smooth, block_rows=8))
    assert jnp.allclose(out, ref, rtol=1e-5, atol=1e-5), (out, ref)

    # 3) bf16 prediction: exercises 16-row sublane rounding + in-kernel
    #    promotion (no explicit full-tile cast).
    B, T, V = 2, 8, 32
    pred, tgt, msk = _make_inputs(k_c, B, T, V, jnp.bfloat16)
    ref = _reference(pred, tgt, msk, size=V, smooth=smooth)
    out = jax.block_until_ready(loss_with_ls(pred, tgt, msk, size=V, smooth=smooth))
    assert jnp.allclose(out, ref, rtol=1e-5, atol=1e-5), (out, ref)

    print("KERNEL_OK")
</pallas_src>

<mosaic_0001>
module attributes {stable_mosaic.version = 11 : i64} {
  func.func @_loss_ls_kernel(%arg0: i32, %arg1: memref<8x32xf32, #tpu.memory_space<vmem>>, %arg2: memref<8x2xf32, #tpu.memory_space<vmem>>, %arg3: memref<8x1xf32, #tpu.memory_space<vmem>>) attributes {dimension_semantics = [#tpu.dimension_semantics<parallel>], iteration_bounds = array<i64: 2>, scalar_prefetch = 0 : i64, scratch_operands = 0 : i64, tpu.core_type = #tpu.core_type<tc>, window_params = [{transform_indices = @transform_0, window_bounds = array<i64: 8, 32>}, {transform_indices = @transform_1, window_bounds = array<i64: 8, 2>}, {transform_indices = @transform_2, window_bounds = array<i64: 8, 1>}]} {
    %c0 = arith.constant 0 : index
    %c0_0 = arith.constant 0 : index
    %0 = vector.load %arg1[%c0, %c0_0] : memref<8x32xf32, #tpu.memory_space<vmem>>, vector<8x32xf32>
    %c0_1 = arith.constant 0 : index
    %c0_2 = arith.constant 0 : index
    %1 = vector.load %arg2[%c0_1, %c0_2] : memref<8x2xf32, #tpu.memory_space<vmem>>, vector<8x2xf32>
    %2 = vector.extract_strided_slice %1 {offsets = [0, 0], sizes = [8, 1], strides = [1, 1]} : vector<8x2xf32> to vector<8x1xf32>
    %3 = arith.fptosi %2 : vector<8x1xf32> to vector<8x1xi32>
    %4 = vector.extract_strided_slice %1 {offsets = [0, 1], sizes = [8, 1], strides = [1, 1]} : vector<8x2xf32> to vector<8x1xf32>
    %5 = tpu.iota {dimensions = array<i32: 1>} : vector<1x32xi32>
    %6 = vector.broadcast %5 : vector<1x32xi32> to vector<8x32xi32>
    %7 = vector.broadcast %3 : vector<8x1xi32> to vector<8x32xi32>
    %8 = arith.cmpi eq, %6, %7 : vector<8x32xi32>
    %cst = arith.constant 0.899999976 : f32
    %cst_3 = arith.constant 0.0032258064 : f32
    %9 = vector.broadcast %cst : f32 to vector<8x32xf32>
    %10 = vector.broadcast %cst_3 : f32 to vector<8x32xf32>
    %11 = arith.select %8, %9, %10 : vector<8x32xi1>, vector<8x32xf32>
    %12 = arith.mulf %11, %0 : vector<8x32xf32>
    %cst_4 = arith.constant dense<0.000000e+00> : vector<8xf32>
    %13 = vector.multi_reduction <add>, %12, %cst_4 [1] : vector<8x32xf32> to vector<8xf32>
    %14 = vector.shape_cast %13 : vector<8xf32> to vector<8x1xf32>
    %cst_5 = arith.constant -0.668481708 : f32
    %15 = vector.broadcast %cst_5 : f32 to vector<8x1xf32>
    %16 = arith.subf %15, %14 : vector<8x1xf32>
    %17 = arith.mulf %16, %4 : vector<8x1xf32>
    %c0_6 = arith.constant 0 : index
    %c0_7 = arith.constant 0 : index
    %18 = vector.load %arg3[%c0_6, %c0_7] : memref<8x1xf32, #tpu.memory_space<vmem>>, vector<8x1xf32>
    tpu.vector_store %arg3[%c0_6, %c0_7], %17 {strides = array<i32>} : memref<8x1xf32, #tpu.memory_space<vmem>>, vector<8x1xf32>,
    return
  }
  func.func @transform_0(%arg0: i32) -> (i32, i32) {
    %c0_i32 = arith.constant 0 : i32
    %c0_i32_0 = arith.constant 0 : i32
    return %arg0, %c0_i32 : i32, i32
  }
  func.func @transform_1(%arg0: i32) -> (i32, i32) {
    %c0_i32 = arith.constant 0 : i32
    %c0_i32_0 = arith.constant 0 : i32
    return %arg0, %c0_i32 : i32, i32
  }
  func.func @transform_2(%arg0: i32) -> (i32, i32) {
    %c0_i32 = arith.constant 0 : i32
    %c0_i32_0 = arith.constant 0 : i32
    return %arg0, %c0_i32 : i32, i32
  }
}

</mosaic_0001>

<llo_original>
// kernel: tpu_custom_call.1
$region0: #{tpu_custom_call.1}
  #allocation0 [shape = 'u32[]', space=smem, size = 0x4, offset = 0x4, fixed_abs, tag = 'smem constant byte address 0x4 - core index']
  #allocation1 [shape = 'u32[144,128]{1,0:T(1,128)}', space=vmem, size = 0x12000, scoped, tag = 'internal scratch']
  %s0 = inlined_call_operand.vmem [shape: f32[16,32], index: 0, kind: input, shape index: {}]
  %s1 = inlined_call_operand.vmem [shape: f32[16,2], index: 1, kind: input, shape index: {}]
  %s2 = inlined_call_operand.vmem [shape: f32[16,1], index: 2, kind: output, shape index: {}]
  %s3 = sld [smem:[#allocation0]]
  $region41: #{tpu_custom_call.1} parent=0
    _
  %s5 = ssub.s32 1, %s3
  %s6 = scalar_select 0, %s5, %s3
  loop: start=0, step=1, limit=4
  $region2: #{tpu_custom_call.1} parent=0 // loop_pre_header
    _
  $region3: #{tpu_custom_call.1} parent=0 // loop_header
    %s8 = sphi 0, %s12
    %p9 = scmp.ge.s32.totalorder %s8, 4
    %s18 = sphi 0, %s20
    %s21 = sphi 0, %s18
    %s22 = sphi 0, %s21
    %s38 = sphi 0, %s22
    %s44 = sphi 0, %s46
    %s47 = sphi 0, %s44
    %s48 = sphi 0, %s47
    %s64 = sphi 0, %s48
    %s70 = sphi 0, %s72
    %s73 = sphi 0, %s70
    %s74 = sphi 0, %s73
    %s90 = sphi 0, %s74
  $region4: #{tpu_custom_call.1} parent=0 // loop_header_branch
    %11 = sbr.rel (%p9) target = $region8
  $region5: #{tpu_custom_call.1} parent=0 // loop_body
    %s13 = ssub.s32 %s8, 1
    %s14 = ssub.s32 %s8, 2
    %s15 = sadd.s32 %s8, 1
    %s16 = ssub.s32 %s8, %s15
    %p17 = scmp.eq.s32.totalorder %s16, 0
    %s19 = sadd.s32 %s18, 1
    %s20 = scalar_select %p17, %s18, %s19
    %p23 = pneg %p17
    %p24 = scmp.eq.s32.totalorder %s8, 1
    %p25 = por %p23, %p24
    %p26 = scmp.ne.s32.totalorder %s18, %s21
    %p27 = scmp.eq.s32.totalorder %s8, 0
    %p28 = por %p26, %p27
    %p29 = scmp.ne.s32.totalorder %s18, %s21
    %p30 = scmp.eq.s32.totalorder %s13, 1
    %p31 = por %p29, %p30
    %p32 = scmp.ne.s32.totalorder %s21, %s22
    %p33 = scmp.eq.s32.totalorder %s13, 0
    %p34 = por %p32, %p33
    %p35 = scmp.ne.s32.totalorder %s21, %s22
    %p36 = scmp.eq.s32.totalorder %s14, 1
    %p37 = por %p35, %p36
    %p39 = scmp.ne.s32.totalorder %s22, %s38
    %p40 = scmp.eq.s32.totalorder %s14, 0
    %p41 = por %p39, %p40
    %s42 = ssub.s32 %s8, %s15
    %p43 = scmp.eq.s32.totalorder %s42, 0
    %s45 = sadd.s32 %s44, 1
    %s46 = scalar_select %p43, %s44, %s45
    %p49 = pneg %p43
    %p50 = scmp.eq.s32.totalorder %s8, 1
    %p51 = por %p49, %p50
    %p52 = scmp.ne.s32.totalorder %s44, %s47
    %p53 = scmp.eq.s32.totalorder %s8, 0
    %p54 = por %p52, %p53
    %p55 = scmp.ne.s32.totalorder %s44, %s47
    %p56 = scmp.eq.s32.totalorder %s13, 1
    %p57 = por %p55, %p56
    %p58 = scmp.ne.s32.totalorder %s47, %s48
    %p59 = scmp.eq.s32.totalorder %s13, 0
    %p60 = por %p58, %p59
    %p61 = scmp.ne.s32.totalorder %s47, %s48
    %p62 = scmp.eq.s32.totalorder %s14, 1
    %p63 = por %p61, %p62
    %p65 = scmp.ne.s32.totalorder %s48, %s64
    %p66 = scmp.eq.s32.totalorder %s14, 0
    %p67 = por %p65, %p66
    %s68 = ssub.s32 %s8, %s15
    %p69 = scmp.eq.s32.totalorder %s68, 0
    %s71 = sadd.s32 %s70, 1
    %s72 = scalar_select %p69, %s70, %s71
    %p75 = pneg %p69
    %p76 = scmp.eq.s32.totalorder %s8, 1
    %p77 = por %p75, %p76
    %p78 = scmp.ne.s32.totalorder %s70, %s73
    %p79 = scmp.eq.s32.totalorder %s8, 0
    %p80 = por %p78, %p79
    %p81 = scmp.ne.s32.totalorder %s70, %s73
    %p82 = scmp.eq.s32.totalorder %s13, 1
    %p83 = por %p81, %p82
    %p84 = scmp.ne.s32.totalorder %s73, %s74
    %p85 = scmp.eq.s32.totalorder %s13, 0
    %p86 = por %p84, %p85
    %p87 = scmp.ne.s32.totalorder %s73, %s74
    %p88 = scmp.eq.s32.totalorder %s14, 1
    %p89 = por %p87, %p88
    %p91 = scmp.ne.s32.totalorder %s74, %s90
    %p92 = scmp.eq.s32.totalorder %s14, 0
    %p93 = por %p91, %p92
    %p94 = scmp.le.s32.totalorder 1, %s8
    %p95 = scmp.lt.s32.totalorder %s8, 3
    %p96 = pnand %p94, %p95
    %p97 = pneg %p96
    // Predicated region
    $region9: #{tpu_custom_call.1} parent=5 // pred_check
      _
    $region10: #{tpu_custom_call.1} parent=5 // pred_check_branch
      %99 = sbr.rel (%p96) target = $region12
    $region11: #{tpu_custom_call.1} parent=5 // pred_region
      %s100 = ssub.s32 %s8, 1
    $region12: #{tpu_custom_call.1} parent=5 // pred_fallthru
      _
    %p101 = scmp.lt.s32.totalorder %s8, 2
    // Predicated region
    $region13: #{tpu_custom_call.1} parent=5 // pred_check
      %p102 = pneg %p101
    $region14: #{tpu_custom_call.1} parent=5 // pred_check_branch
      %104 = sbr.rel (%p102) target = $region16
    $region15: #{tpu_custom_call.1} parent=5 // pred_region
      // Predicated region
      $region17: #{tpu_custom_call.1} parent=15 // pred_check
        %p105 = pneg %p28
      $region18: #{tpu_custom_call.1} parent=15 // pred_check_branch
        %107 = sbr.rel (%p105) target = $region20
      $region19: #{tpu_custom_call.1} parent=15 // pred_region
        %p108 = scmp.lt.s32.totalorder %s8, 1
        %s109 = scalar_select %p108, %s8, 1
        %s110 = smul.addr %s109, 8
        %s111 = scalar_lea.vmem %s0, %s110
      $region20: #{tpu_custom_call.1} parent=15 // pred_fallthru
        _
      // Predicated region
      $region21: #{tpu_custom_call.1} parent=15 // pred_check
        %p112 = pneg %p54
      $region22: #{tpu_custom_call.1} parent=15 // pred_check_branch
        %114 = sbr.rel (%p112) target = $region24
      $region23: #{tpu_custom_call.1} parent=15 // pred_region
        %p115 = scmp.lt.s32.totalorder %s8, 1
        %s116 = scalar_select %p115, %s8, 1
        %s117 = smul.addr %s116, 8
        %s118 = scalar_lea.vmem %s1, %s117
      $region24: #{tpu_custom_call.1} parent=15 // pred_fallthru
        _
    $region16: #{tpu_custom_call.1} parent=5 // pred_fallthru
      _
    %p119 = scmp.le.s32.totalorder 1, %s8
    %p120 = scmp.lt.s32.totalorder %s8, 3
    %p121 = pnand %p119, %p120
    %p122 = pneg %p121
    // Predicated region
    $region25: #{tpu_custom_call.1} parent=5 // pred_check
      _
    $region26: #{tpu_custom_call.1} parent=5 // pred_check_branch
      %124 = sbr.rel (%p121) target = $region28
    $region27: #{tpu_custom_call.1} parent=5 // pred_region
      %s125 = ssub.s32 %s8, 1
      %p126 = scmp.lt.s32.totalorder %s13, 1
      %s127 = scalar_select %p126, %s13, 1
      %s128 = smul.addr %s127, 8
      %s129 = scalar_lea.vmem %s0, %s128
      %p130 = pneg %p34
      %p131 = pneg %p31
      %p132 = scmp.lt.s32.totalorder %s13, 1
      %s133 = scalar_select %p132, %s13, 1
      %s134 = smul.addr %s133, 8
      %s135 = scalar_lea.vmem %s1, %s134
      %p136 = pneg %p60
      %p137 = pneg %p57
      %p138 = pneg %p86
      %p139 = pneg %p83
      %p140 = scmp.lt.s32.totalorder %s13, 1
      %s141 = scalar_select %p140, %s13, 1
      %s142 = smul.addr %s141, 8
      %s143 = scalar_lea.vmem %s2, %s142
      %p144 = scmp.lt.s32.totalorder %s13, 1
      %s145 = scalar_select %p144, %s13, 1
      %s146 = smul.addr %s145, 8
      %s147 = scalar_lea.vmem %s0, %s146
      %p148 = scmp.lt.s32.totalorder %s13, 1
      %s149 = scalar_select %p148, %s13, 1
      %s150 = smul.addr %s149, 8
      %s151 = scalar_lea.vmem %s1, %s150
      %p152 = scmp.lt.s32.totalorder %s13, 1
      %s153 = scalar_select %p152, %s13, 1
      %s154 = smul.addr %s153, 8
      %s155 = scalar_lea.vmem %s2, %s154
      %v156 = vld [vmem:[%s147] sm:$0xff]
      %v157 = vld [vmem:[%s151] sm:$0xff]
      %v158 = vcvt.f32.s32.to.zero.pseudo %v157
      %v159 = vlaneseq
      %v160 = vand.u32 %v159, 127
      %161 = vset.pattern.permute.xlu0 0
      %162 = vperm.xlu0 %161, %v158
      %v163 = vpop.permute.xlu0 %162
      %vm164 = vcmp.eq.s32.totalorder %v160, %v163
      %v165 = vsel %vm164, 0.9, 0.0032258064
      %v166 = vmul.f32 %v165, %v156
      %vm167 = vcmask 261120
      %v168 = vsel %vm167, %v166, 0.0
      %169 = vadd.xlane.f32.xlu0 %v168
      %v170 = vpop.xlane.xlu0 %169
      %v171 = vsub.f32 -0.6684817, %v170
      %v172 = vmul.f32 %v171, %v157
      %174 = vrot.lane.b32.xlu0 %v172, 127
      %v175 = vpop.permute.xlu0 %174
      %vm177 = vcmask 7168
      %178 = vst.msk [vmem:[%s155] sm:$0xff] %vm177, %v175
      %p179 = scmp.lt.s32.totalorder %s13, 1
      %s180 = scalar_select %p179, %s13, 1
      %s181 = smul.addr %s180, 8
      %s182 = scalar_lea.vmem %s2, %s181
      // Predicated region
      $region29: #{tpu_custom_call.1} parent=27 // pred_check
        %p183 = pneg %p83
      $region30: #{tpu_custom_call.1} parent=27 // pred_check_branch
        %185 = sbr.rel (%p183) target = $region32
      $region31: #{tpu_custom_call.1} parent=27 // pred_region
        _
      $region32: #{tpu_custom_call.1} parent=27 // pred_fallthru
        _
    $region28: #{tpu_custom_call.1} parent=5 // pred_fallthru
      _
    %p186 = scmp.le.s32.totalorder 2, %s8
    // Predicated region
    $region33: #{tpu_custom_call.1} parent=5 // pred_check
      %p187 = pneg %p186
    $region34: #{tpu_custom_call.1} parent=5 // pred_check_branch
      %189 = sbr.rel (%p187) target = $region36
    $region35: #{tpu_custom_call.1} parent=5 // pred_region
      %s190 = ssub.s32 %s8, 2
      // Predicated region
      $region37: #{tpu_custom_call.1} parent=35 // pred_check
        %p191 = pneg %p89
      $region38: #{tpu_custom_call.1} parent=35 // pred_check_branch
        %193 = sbr.rel (%p191) target = $region40
      $region39: #{tpu_custom_call.1} parent=35 // pred_region
        %p194 = scmp.lt.s32.totalorder %s14, 1
        %s195 = scalar_select %p194, %s14, 1
        %s196 = smul.addr %s195, 8
        %s197 = scalar_lea.vmem %s2, %s196
      $region40: #{tpu_custom_call.1} parent=35 // pred_fallthru
        _
    $region36: #{tpu_custom_call.1} parent=5 // pred_fallthru
      _
  $region6: #{tpu_custom_call.1} parent=0 // loop_footer
    %s12 = sadd.s32 1, %s8
  $region7: #{tpu_custom_call.1} parent=0 // loop_footer_branch
    %7 = sbr.rel target = $region3
  $region8: #{tpu_custom_call.1} parent=0 // loop_exit
    _

</llo_original>
